<compile_context>
chip_gen: v7x
topology: tpu7x:2x2x1
jax: 0.10.0
libtpu: 0.0.40
codegen_flags: <defaults>
</compile_context>

<pallas_src>
import jax
import jax.numpy as jnp
from jax.experimental import pallas as pl
from jax.experimental.pallas import tpu as pltpu

# Hyperparameters (small, consistent with the module's intent).
VOCAB = 26          # amino-acid alphabet size
NUM_INPUTS = 3      # MIMO: sequences per example == number of output heads
SEQ_LEN = 16
EMBED_DIM = 8
C_IN = NUM_INPUTS * EMBED_DIM   # 24 (concatenated embeddings)
CONV_CHANNELS = 32
KERNEL_SIZE = 5
HIDDEN = 32
BATCH = 2

K_CIN = KERNEL_SIZE * C_IN      # 120  (im2col contraction dim)
K_CIN_PAD = 128                 # pad contraction dim to a full lane width
BIAS_COL = K_CIN                # padded patch column carrying the conv bias
OUT_PAD = 128                   # pad the tiny head output -> unmasked stores
TB_MAX = 512                    # max batch items per grid step


def _round_up(x, m):
    return ((x + m - 1) // m) * m


def _choose_tiling(batch):
    """Balanced batch tiles; >=2 tiles for larger batches (v7x dual TC)."""
    n_tiles = max(1, -(-batch // TB_MAX))
    if batch >= 64 and n_tiles < 2:
        n_tiles = 2
    tb = _round_up(-(-batch // n_tiles), 8)
    return tb, n_tiles, tb * n_tiles


def protmimo_kernel(x_ref, convw_ref, w1_ref, b1_ref, w2_ref, b2_ref, out_ref):
    # x_ref:    (TB*L, 128) bf16 im2col patches (col 120 == 1.0 bias carrier).
    # convw_ref:(128, Cc)   bf16 conv weight in im2col layout (row 120 == bias).
    # w1:       (Cc, H)     bf16, already scaled by 1/L (mean-pool fold).
    # w2/b2:    zero-padded to OUT_PAD columns.
    tb = out_ref.shape[0]

    # --- Conv1d ('same') + bias as ONE im2col matmul on the MXU, ReLU on VPU ---
    conv = jnp.dot(x_ref[...], convw_ref[...],
                   preferred_element_type=jnp.float32)        # (TB*L, Cc) f32
    conv = jnp.maximum(conv, 0.0)

    # --- Mean pool: free sublane factorization + XLU sum (1/L folded into w1) ---
    pooled = jnp.sum(conv.reshape(tb, SEQ_LEN, CONV_CHANNELS), axis=1)  # (TB, Cc)

    # --- MLP head: Linear + ReLU + Linear (bf16 MXU inputs, f32 accumulate) ---
    h = jnp.dot(pooled.astype(w1_ref.dtype), w1_ref[...],
                preferred_element_type=jnp.float32) + b1_ref[...]
    h = jnp.maximum(h, 0.0)
    out = jnp.dot(h.astype(w2_ref.dtype), w2_ref[...],
                  preferred_element_type=jnp.float32) + b2_ref[...]
    out_ref[...] = out.astype(out_ref.dtype)                  # (TB, OUT_PAD)


def init_params(seed: int = 0):
    key = jax.random.PRNGKey(seed)
    k_emb, k_cw, k_w1, k_w2 = jax.random.split(key, 4)
    return {
        # nn.Embedding(VOCAB, EMBED_DIM)
        "embedding": 0.1 * jax.random.normal(k_emb, (VOCAB, EMBED_DIM),
                                             jnp.float32),
        # nn.Conv1d(C_IN, CONV_CHANNELS, KERNEL_SIZE, padding='same')
        "conv_w": 0.1 * jax.random.normal(k_cw, (CONV_CHANNELS, C_IN,
                                                 KERNEL_SIZE), jnp.float32),
        "conv_b": jnp.zeros((CONV_CHANNELS,), jnp.float32),
        # nn.Linear(CONV_CHANNELS, HIDDEN)
        "fc1_w": 0.1 * jax.random.normal(k_w1, (HIDDEN, CONV_CHANNELS),
                                         jnp.float32),
        "fc1_b": jnp.zeros((HIDDEN,), jnp.float32),
        # nn.Linear(HIDDEN, NUM_INPUTS) -- one fluorescence prediction per input
        "fc2_w": 0.1 * jax.random.normal(k_w2, (NUM_INPUTS, HIDDEN),
                                         jnp.float32),
        "fc2_b": jnp.zeros((NUM_INPUTS,), jnp.float32),
    }


def prepare_params(params):
    """One-time re-layout of parameters into kernel form (off the hot path)."""
    # Conv weight in im2col layout: (C_out, C_in, K) -> (K*C_in, C_out), padded
    # to 128 rows; the conv bias is folded into padded row BIAS_COL.
    conv_w = jnp.transpose(params["conv_w"], (2, 1, 0)).reshape(K_CIN,
                                                                CONV_CHANNELS)
    conv_w = jnp.pad(conv_w, ((0, K_CIN_PAD - K_CIN), (0, 0)))
    conv_w = conv_w.at[BIAS_COL].set(params["conv_b"])
    conv_w = conv_w.astype(jnp.bfloat16)

    # Fold the 1/L mean-pool into fc1:  mean(conv) @ w1 == sum(conv) @ (w1/L).
    w1 = (params["fc1_w"].T / SEQ_LEN).astype(jnp.bfloat16)   # (Cc, HIDDEN)
    b1 = params["fc1_b"].reshape(1, HIDDEN).astype(jnp.float32)
    w2 = jnp.pad(params["fc2_w"].T,
                 ((0, 0), (0, OUT_PAD - NUM_INPUTS))).astype(jnp.bfloat16)
    b2 = jnp.pad(params["fc2_b"],
                 (0, OUT_PAD - NUM_INPUTS)).reshape(1, OUT_PAD).astype(
        jnp.float32)
    return {"embedding": params["embedding"], "conv_w": conv_w,
            "w1": w1, "b1": b1, "w2": w2, "b2": b2}


def protmimo_forward(tokens, prep):
    """tokens: int32 (B, NUM_INPUTS, SEQ_LEN) -> (B, NUM_INPUTS) f32."""
    B = tokens.shape[0]

    # ---- Glue (embedding gather + im2col + layout/padding) in plain JAX ----
    emb = prep["embedding"][tokens]                          # (B, NI, L, E)
    x = jnp.transpose(emb, (0, 2, 1, 3)).reshape(B, SEQ_LEN, C_IN)

    # PyTorch Conv1d 'same' padding (exact for odd K, stride 1 as used here).
    pad_l = (KERNEL_SIZE - 1) // 2
    pad_r = KERNEL_SIZE - 1 - pad_l
    xp = jnp.pad(x, ((0, 0), (pad_l, pad_r), (0, 0)))        # (B, L+K-1, C_IN)

    # im2col via K static slices + concat (no XLA gather); column order is
    # (k outer, c_in inner) to match conv_w's layout.
    patches = jnp.concatenate(
        [xp[:, k:k + SEQ_LEN, :] for k in range(KERNEL_SIZE)],
        axis=-1)                                             # (B, L, K*C_IN)

    tb, n_tiles, b_pad = _choose_tiling(B)

    # Pad batch (balanced tiles) and contraction dim 120 -> 128; set the bias
    # carrier column to 1.0 (conv_b lives in conv_w row BIAS_COL).
    patches = jnp.pad(patches,
                      ((0, b_pad - B), (0, 0), (0, K_CIN_PAD - K_CIN)))
    patches = patches.at[:, :, BIAS_COL].set(1.0)
    x_rows = patches.reshape(b_pad * SEQ_LEN, K_CIN_PAD).astype(jnp.bfloat16)

    const = lambda shape: pl.BlockSpec(shape, lambda i: (0,) * len(shape))
    out = pl.pallas_call(
        protmimo_kernel,
        out_shape=jax.ShapeDtypeStruct((b_pad, OUT_PAD), jnp.float32),
        grid=(n_tiles,),
        in_specs=[
            # activations: tiled along the batch axis, pipelined HBM->VMEM
            pl.BlockSpec((tb * SEQ_LEN, K_CIN_PAD), lambda i: (i, 0)),
            # weights / biases: VMEM-resident (constant index maps)
            const((K_CIN_PAD, CONV_CHANNELS)),
            const((CONV_CHANNELS, HIDDEN)),
            const((1, HIDDEN)),
            const((HIDDEN, OUT_PAD)),
            const((1, OUT_PAD)),
        ],
        out_specs=pl.BlockSpec((tb, OUT_PAD), lambda i: (i, 0)),
        compiler_params=pltpu.CompilerParams(
            # batch tiles are independent -> v7x's 2 TensorCores split them
            dimension_semantics=("parallel",)),
    )(x_rows, prep["conv_w"], prep["w1"], prep["b1"], prep["w2"], prep["b2"])

    # Drop batch padding and the zero-padded head columns.
    return out[:B, :NUM_INPUTS]


def reference_forward(tokens, params):
    """Pure-JAX f32 reference (mirrors the PyTorch semantics)."""
    B = tokens.shape[0]
    emb = params["embedding"][tokens]
    x = jnp.transpose(emb, (0, 2, 1, 3)).reshape(B, SEQ_LEN, C_IN)
    pad_l = (KERNEL_SIZE - 1) // 2
    xp = jnp.pad(x, ((0, 0), (pad_l, KERNEL_SIZE - 1 - pad_l), (0, 0)))
    conv_w = jnp.transpose(params["conv_w"], (2, 1, 0))
    acc = jnp.zeros((B, SEQ_LEN, CONV_CHANNELS), jnp.float32)
    for k in range(KERNEL_SIZE):
        acc = acc + jnp.einsum("bld,dc->blc", xp[:, k:k + SEQ_LEN, :],
                               conv_w[k])
    conv = jax.nn.relu(acc + params["conv_b"])
    pooled = jnp.mean(conv, axis=1)
    h = jax.nn.relu(pooled @ params["fc1_w"].T + params["fc1_b"])
    return h @ params["fc2_w"].T + params["fc2_b"]


if __name__ == "__main__":
    params = init_params(0)
    prep = prepare_params(params)        # one-time parameter re-layout
    key = jax.random.PRNGKey(0)
    tokens = jax.random.randint(key, (BATCH, NUM_INPUTS, SEQ_LEN), 0, VOCAB,
                                dtype=jnp.int32)

    forward = jax.jit(protmimo_forward)
    out = forward(tokens, prep)
    out = jax.block_until_ready(out)

    ref = reference_forward(tokens, params)
    assert out.shape == (BATCH, NUM_INPUTS)
    # bf16 MXU inputs with f32 accumulation -> loosened tolerance vs f32 ref.
    assert jnp.allclose(out, ref, atol=2e-2, rtol=1e-3), \
        "mismatch vs JAX reference"
    print("KERNEL_OK")
</pallas_src>

<mosaic_0001>
module attributes {stable_mosaic.version = 11 : i64} {
  func.func @protmimo_kernel(%arg0: i32, %arg1: memref<128x128xbf16, #tpu.memory_space<vmem>>, %arg2: memref<128x32xbf16, #tpu.memory_space<vmem>>, %arg3: memref<32x32xbf16, #tpu.memory_space<vmem>>, %arg4: memref<1x32xf32, #tpu.memory_space<vmem>>, %arg5: memref<32x128xbf16, #tpu.memory_space<vmem>>, %arg6: memref<1x128xf32, #tpu.memory_space<vmem>>, %arg7: memref<8x128xf32, #tpu.memory_space<vmem>>) attributes {dimension_semantics = [#tpu.dimension_semantics<parallel>], iteration_bounds = array<i64: 1>, scalar_prefetch = 0 : i64, scratch_operands = 0 : i64, tpu.core_type = #tpu.core_type<tc>, window_params = [{transform_indices = @transform_0, window_bounds = array<i64: 128, 128>}, {pipeline_mode = #tpu.pipeline_mode<synchronous>, transform_indices = @transform_1, window_bounds = array<i64: 128, 32>}, {pipeline_mode = #tpu.pipeline_mode<synchronous>, transform_indices = @transform_2, window_bounds = array<i64: 32, 32>}, {pipeline_mode = #tpu.pipeline_mode<synchronous>, transform_indices = @transform_3, window_bounds = array<i64: 1, 32>}, {pipeline_mode = #tpu.pipeline_mode<synchronous>, transform_indices = @transform_4, window_bounds = array<i64: 32, 128>}, {pipeline_mode = #tpu.pipeline_mode<synchronous>, transform_indices = @transform_5, window_bounds = array<i64: 1, 128>}, {transform_indices = @transform_6, window_bounds = array<i64: 8, 128>}]} {
    %c0 = arith.constant 0 : index
    %c0_0 = arith.constant 0 : index
    %0 = vector.load %arg1[%c0, %c0_0] : memref<128x128xbf16, #tpu.memory_space<vmem>>, vector<128x128xbf16>
    %c0_1 = arith.constant 0 : index
    %c0_2 = arith.constant 0 : index
    %1 = vector.load %arg2[%c0_1, %c0_2] : memref<128x32xbf16, #tpu.memory_space<vmem>>, vector<128x32xbf16>
    %cst = arith.constant dense<0.000000e+00> : vector<128x32xf32>
    %2 = tpu.matmul %0, %1, %cst {dimension_numbers = #tpu.dot_dimension_numbers<[1], [0], [0], [1], [0, 0, 1, 1], [], []>} : vector<128x128xbf16>, vector<128x32xbf16>, vector<128x32xf32> -> vector<128x32xf32>
    %cst_3 = arith.constant 0.000000e+00 : f32
    %3 = vector.broadcast %cst_3 : f32 to vector<128x32xf32>
    %4 = arith.maximumf %2, %3 : vector<128x32xf32>
    %5 = vector.shape_cast %4 : vector<128x32xf32> to vector<8x16x32xf32>
    %cst_4 = arith.constant dense<0.000000e+00> : vector<8x32xf32>
    %6 = vector.multi_reduction <add>, %5, %cst_4 [1] : vector<8x16x32xf32> to vector<8x32xf32>
    %7 = arith.truncf %6 : vector<8x32xf32> to vector<8x32xbf16>
    %c0_5 = arith.constant 0 : index
    %c0_6 = arith.constant 0 : index
    %8 = vector.load %arg3[%c0_5, %c0_6] : memref<32x32xbf16, #tpu.memory_space<vmem>>, vector<32x32xbf16>
    %cst_7 = arith.constant dense<0.000000e+00> : vector<8x32xf32>
    %9 = tpu.matmul %7, %8, %cst_7 {dimension_numbers = #tpu.dot_dimension_numbers<[1], [0], [0], [1], [0, 0, 1, 1], [], []>} : vector<8x32xbf16>, vector<32x32xbf16>, vector<8x32xf32> -> vector<8x32xf32>
    %c0_8 = arith.constant 0 : index
    %c0_9 = arith.constant 0 : index
    %10 = vector.load %arg4[%c0_8, %c0_9] : memref<1x32xf32, #tpu.memory_space<vmem>>, vector<1x32xf32>
    %11 = vector.broadcast %10 : vector<1x32xf32> to vector<8x32xf32>
    %12 = arith.addf %9, %11 : vector<8x32xf32>
    %cst_10 = arith.constant 0.000000e+00 : f32
    %13 = vector.broadcast %cst_10 : f32 to vector<8x32xf32>
    %14 = arith.maximumf %12, %13 : vector<8x32xf32>
    %15 = arith.truncf %14 : vector<8x32xf32> to vector<8x32xbf16>
    %c0_11 = arith.constant 0 : index
    %c0_12 = arith.constant 0 : index
    %16 = vector.load %arg5[%c0_11, %c0_12] : memref<32x128xbf16, #tpu.memory_space<vmem>>, vector<32x128xbf16>
    %cst_13 = arith.constant dense<0.000000e+00> : vector<8x128xf32>
    %17 = tpu.matmul %15, %16, %cst_13 {dimension_numbers = #tpu.dot_dimension_numbers<[1], [0], [0], [1], [0, 0, 1, 1], [], []>} : vector<8x32xbf16>, vector<32x128xbf16>, vector<8x128xf32> -> vector<8x128xf32>
    %c0_14 = arith.constant 0 : index
    %c0_15 = arith.constant 0 : index
    %18 = vector.load %arg6[%c0_14, %c0_15] : memref<1x128xf32, #tpu.memory_space<vmem>>, vector<1x128xf32>
    %19 = vector.broadcast %18 : vector<1x128xf32> to vector<8x128xf32>
    %20 = arith.addf %17, %19 : vector<8x128xf32>
    %c0_16 = arith.constant 0 : index
    %c0_17 = arith.constant 0 : index
    %21 = vector.load %arg7[%c0_16, %c0_17] : memref<8x128xf32, #tpu.memory_space<vmem>>, vector<8x128xf32>
    tpu.vector_store %arg7[%c0_16, %c0_17], %20 {strides = array<i32>} : memref<8x128xf32, #tpu.memory_space<vmem>>, vector<8x128xf32>,
    return
  }
  func.func @transform_0(%arg0: i32) -> (i32, i32) {
    %c0_i32 = arith.constant 0 : i32
    %c0_i32_0 = arith.constant 0 : i32
    return %arg0, %c0_i32 : i32, i32
  }
  func.func @transform_1(%arg0: i32) -> (i32, i32) {
    %c0_i32 = arith.constant 0 : i32
    %c0_i32_0 = arith.constant 0 : i32
    %c0_i32_1 = arith.constant 0 : i32
    return %c0_i32, %c0_i32_0 : i32, i32
  }
  func.func @transform_2(%arg0: i32) -> (i32, i32) {
    %c0_i32 = arith.constant 0 : i32
    %c0_i32_0 = arith.constant 0 : i32
    %c0_i32_1 = arith.constant 0 : i32
    return %c0_i32, %c0_i32_0 : i32, i32
  }
  func.func @transform_3(%arg0: i32) -> (i32, i32) {
    %c0_i32 = arith.constant 0 : i32
    %c0_i32_0 = arith.constant 0 : i32
    %c0_i32_1 = arith.constant 0 : i32
    return %c0_i32, %c0_i32_0 : i32, i32
  }
  func.func @transform_4(%arg0: i32) -> (i32, i32) {
    %c0_i32 = arith.constant 0 : i32
    %c0_i32_0 = arith.constant 0 : i32
    %c0_i32_1 = arith.constant 0 : i32
    return %c0_i32, %c0_i32_0 : i32, i32
  }
  func.func @transform_5(%arg0: i32) -> (i32, i32) {
    %c0_i32 = arith.constant 0 : i32
    %c0_i32_0 = arith.constant 0 : i32
    %c0_i32_1 = arith.constant 0 : i32
    return %c0_i32, %c0_i32_0 : i32, i32
  }
  func.func @transform_6(%arg0: i32) -> (i32, i32) {
    %c0_i32 = arith.constant 0 : i32
    %c0_i32_0 = arith.constant 0 : i32
    return %arg0, %c0_i32 : i32, i32
  }
}

</mosaic_0001>

<llo_original>
// kernel: protmimo_forward.1
$region0: #{protmimo_forward.1}
  #allocation0 [shape = 'u32[]', space=smem, size = 0x4, offset = 0x4, fixed_abs, tag = 'smem constant byte address 0x4 - core index']
  #allocation1 [shape = 'u32[144,128]{1,0:T(1,128)}', space=vmem, size = 0x12000, scoped, tag = 'internal scratch']
  %s0 = inlined_call_operand.vmem [shape: bf16[128,128], index: 0, kind: input, shape index: {}]
  %s1 = inlined_call_operand.vmem [shape: bf16[128,32], index: 1, kind: input, shape index: {}]
  %s2 = inlined_call_operand.vmem [shape: bf16[32,32], index: 2, kind: input, shape index: {}]
  %s3 = inlined_call_operand.vmem [shape: f32[1,32], index: 3, kind: input, shape index: {}]
  %s4 = inlined_call_operand.vmem [shape: bf16[32,128], index: 4, kind: input, shape index: {}]
  %s5 = inlined_call_operand.vmem [shape: f32[1,128], index: 5, kind: input, shape index: {}]
  %s6 = inlined_call_operand.vmem [shape: f32[8,128], index: 6, kind: output, shape index: {}]
  %s7 = sld [smem:[#allocation0]]
  $region34: #{protmimo_forward.1} parent=0
    _
  %s9 = ssub.s32 1, %s7
  %s10 = scalar_select 0, %s9, %s7
  // Predicated region
  $region2: #{protmimo_forward.1} parent=0 // pred_check
    _
  $region3: #{protmimo_forward.1} parent=0 // pred_check_branch
    %12 = sbr.rel (0) target = $region5
  $region4: #{protmimo_forward.1} parent=0 // pred_region
    _
  $region5: #{protmimo_forward.1} parent=0 // pred_fallthru
    _
  // Predicated region
  $region6: #{protmimo_forward.1} parent=0 // pred_check
    _
  $region7: #{protmimo_forward.1} parent=0 // pred_check_branch
    %14 = sbr.rel (0) target = $region9
  $region8: #{protmimo_forward.1} parent=0 // pred_region
    _
  $region9: #{protmimo_forward.1} parent=0 // pred_fallthru
    _
  // Predicated region
  $region10: #{protmimo_forward.1} parent=0 // pred_check
    _
  $region11: #{protmimo_forward.1} parent=0 // pred_check_branch
    %16 = sbr.rel (0) target = $region13
  $region12: #{protmimo_forward.1} parent=0 // pred_region
    _
  $region13: #{protmimo_forward.1} parent=0 // pred_fallthru
    _
  // Predicated region
  $region14: #{protmimo_forward.1} parent=0 // pred_check
    _
  $region15: #{protmimo_forward.1} parent=0 // pred_check_branch
    %18 = sbr.rel (0) target = $region17
  $region16: #{protmimo_forward.1} parent=0 // pred_region
    _
  $region17: #{protmimo_forward.1} parent=0 // pred_fallthru
    _
  // Predicated region
  $region18: #{protmimo_forward.1} parent=0 // pred_check
    _
  $region19: #{protmimo_forward.1} parent=0 // pred_check_branch
    %20 = sbr.rel (0) target = $region21
  $region20: #{protmimo_forward.1} parent=0 // pred_region
    _
  $region21: #{protmimo_forward.1} parent=0 // pred_fallthru
    _
  // Predicated region
  $region22: #{protmimo_forward.1} parent=0 // pred_check
    _
  $region23: #{protmimo_forward.1} parent=0 // pred_check_branch
    %22 = sbr.rel (0) target = $region25
  $region24: #{protmimo_forward.1} parent=0 // pred_region
    _
  $region25: #{protmimo_forward.1} parent=0 // pred_fallthru
    _
  %v24 = vld [vmem:[%s0] sm:$0xf]
  %v25 = vld [vmem:[%s0 + $0x4] sm:$0xf]
  %v26 = vld [vmem:[%s0 + $0x8] sm:$0xf]
  %v27 = vld [vmem:[%s0 + $0xc] sm:$0xf]
  %v28 = vld [vmem:[%s0 + $0x10] sm:$0xf]
  %v29 = vld [vmem:[%s0 + $0x14] sm:$0xf]
  %v30 = vld [vmem:[%s0 + $0x18] sm:$0xf]
  %v31 = vld [vmem:[%s0 + $0x1c] sm:$0xf]
  %v32 = vld [vmem:[%s0 + $0x20] sm:$0xf]
  %v33 = vld [vmem:[%s0 + $0x24] sm:$0xf]
  %v34 = vld [vmem:[%s0 + $0x28] sm:$0xf]
  %v35 = vld [vmem:[%s0 + $0x2c] sm:$0xf]
  %v36 = vld [vmem:[%s0 + $0x30] sm:$0xf]
  %v37 = vld [vmem:[%s0 + $0x34] sm:$0xf]
  %v38 = vld [vmem:[%s0 + $0x38] sm:$0xf]
  %v39 = vld [vmem:[%s0 + $0x3c] sm:$0xf]
  %v40 = vld [vmem:[%s1] sm:$0xf]
  %v41 = vld [vmem:[%s1 + $0x4] sm:$0xf]
  %v42 = vld [vmem:[%s1 + $0x8] sm:$0xf]
  %v43 = vld [vmem:[%s1 + $0xc] sm:$0xf]
  %v44 = vld [vmem:[%s1 + $0x10] sm:$0xf]
  %v45 = vld [vmem:[%s1 + $0x14] sm:$0xf]
  %v46 = vld [vmem:[%s1 + $0x18] sm:$0xf]
  %v47 = vld [vmem:[%s1 + $0x1c] sm:$0xf]
  %v48 = vld [vmem:[%s1 + $0x20] sm:$0xf]
  %v49 = vld [vmem:[%s1 + $0x24] sm:$0xf]
  %v50 = vld [vmem:[%s1 + $0x28] sm:$0xf]
  %v51 = vld [vmem:[%s1 + $0x2c] sm:$0xf]
  %v52 = vld [vmem:[%s1 + $0x30] sm:$0xf]
  %v53 = vld [vmem:[%s1 + $0x34] sm:$0xf]
  %v54 = vld [vmem:[%s1 + $0x38] sm:$0xf]
  %v55 = vld [vmem:[%s1 + $0x3c] sm:$0xf]
  %v72 = vunpack.c.l.b16 %v24
  %v73 = vunpack.c.l.b16 %v25
  %v74 = vunpack.c.l.b16 %v26
  %v75 = vunpack.c.l.b16 %v27
  %v76 = vunpack.c.l.b16 %v28
  %v77 = vunpack.c.l.b16 %v29
  %v78 = vunpack.c.l.b16 %v30
  %v79 = vunpack.c.l.b16 %v31
  %v80 = vunpack.c.l.b16 %v32
  %v81 = vunpack.c.l.b16 %v33
  %v82 = vunpack.c.l.b16 %v34
  %v83 = vunpack.c.l.b16 %v35
  %v84 = vunpack.c.l.b16 %v36
  %v85 = vunpack.c.l.b16 %v37
  %v86 = vunpack.c.l.b16 %v38
  %v87 = vunpack.c.l.b16 %v39
  %v88 = vpack.c.b16 %v73, %v72
  %v89 = vpack.c.b16 %v75, %v74
  %v90 = vpack.c.b16 %v77, %v76
  %v91 = vpack.c.b16 %v79, %v78
  %v92 = vpack.c.b16 %v81, %v80
  %v93 = vpack.c.b16 %v83, %v82
  %v94 = vpack.c.b16 %v85, %v84
  %v95 = vpack.c.b16 %v87, %v86
  %v120 = vunpack.c.l.b16 %v40
  %v121 = vunpack.c.l.b16 %v41
  %v122 = vunpack.c.l.b16 %v42
  %v123 = vunpack.c.l.b16 %v43
  %v124 = vunpack.c.l.b16 %v44
  %v125 = vunpack.c.l.b16 %v45
  %v126 = vunpack.c.l.b16 %v46
  %v127 = vunpack.c.l.b16 %v47
  %v128 = vunpack.c.l.b16 %v48
  %v129 = vunpack.c.l.b16 %v49
  %v130 = vunpack.c.l.b16 %v50
  %v131 = vunpack.c.l.b16 %v51
  %v132 = vunpack.c.l.b16 %v52
  %v133 = vunpack.c.l.b16 %v53
  %v134 = vunpack.c.l.b16 %v54
  %v135 = vunpack.c.l.b16 %v55
  %v136 = vpack.c.b16 %v121, %v120
  %v137 = vpack.c.b16 %v123, %v122
  %v138 = vpack.c.b16 %v125, %v124
  %v139 = vpack.c.b16 %v127, %v126
  %v140 = vpack.c.b16 %v129, %v128
  %v141 = vpack.c.b16 %v131, %v130
  %v142 = vpack.c.b16 %v133, %v132
  %v143 = vpack.c.b16 %v135, %v134
  %152 = vmatprep.subr.bf16.mxu0 0
  %153 = vmatpush1.bf16.msra.mxu0 %v136
  %154 = vmatprep.subr.bf16.mxu0 0
  %155 = vmatpush1.bf16.msra.mxu0 %v137
  %156 = vmatprep.subr.bf16.mxu0 0
  %157 = vmatpush1.bf16.msra.mxu0 %v138
  %158 = vmatprep.subr.bf16.mxu0 0
  %159 = vmatpush1.bf16.msra.mxu0 %v139
  %160 = vmatprep.subr.bf16.mxu0 0
  %161 = vmatpush1.bf16.msra.mxu0 %v140
  %162 = vmatprep.subr.bf16.mxu0 0
  %163 = vmatpush1.bf16.msra.mxu0 %v141
  %164 = vmatprep.subr.bf16.mxu0 0
  %165 = vmatpush1.bf16.msra.mxu0 %v142
  %166 = vmatprep.subr.bf16.mxu0 0
  %167 = vmatpush1.bf16.msra.mxu0 %v143
  %168 = vmatprep.subr.bf16.mxu0 0
  %169 = vmatpush1.bf16.msra.mxu0 0
  %170 = vmatprep.subr.bf16.mxu0 0
  %171 = vmatpush1.bf16.msra.mxu0 0
  %172 = vmatprep.subr.bf16.mxu0 0
  %173 = vmatpush1.bf16.msra.mxu0 0
  %174 = vmatprep.subr.bf16.mxu0 0
  %175 = vmatpush1.bf16.msra.mxu0 0
  %176 = vmatprep.subr.bf16.mxu0 0
  %177 = vmatpush1.bf16.msra.mxu0 0
  %178 = vmatprep.subr.bf16.mxu0 0
  %179 = vmatpush1.bf16.msra.mxu0 0
  %180 = vmatprep.subr.bf16.mxu0 0
  %181 = vmatpush1.bf16.msra.mxu0 0
  %182 = vmatprep.subr.bf16.mxu0 0
  %183 = vmatpush1.bf16.msra.mxu0 0
  %184 = vmatprep.mubr.bf16.mxu0 0
  %185 = vmatmul.mubr.bf16.gmra.mrb[0].mxu0 %v88
  %v186 = vpop.f32.mrb[0].mxu0
  %v187 = vadd.f32 0.0, %v186
  %v188 = vpop.f32.mrb[0].mxu0
  %v189 = vpop.f32.mrb[0].mxu0
  %v190 = vadd.f32 0.0, %v189
  %v191 = vpop.f32.mrb[0].mxu0
  %192 = vmatprep.mubr.bf16.mxu0 0
  %193 = vmatmul.mubr.bf16.gmra.mrb[0].mxu0 %v89
  %v194 = vpop.f32.mrb[0].mxu0
  %v195 = vadd.f32 0.0, %v194
  %v196 = vpop.f32.mrb[0].mxu0
  %v197 = vpop.f32.mrb[0].mxu0
  %v198 = vadd.f32 0.0, %v197
  %v199 = vpop.f32.mrb[0].mxu0
  %200 = vmatprep.mubr.bf16.mxu0 0
  %201 = vmatmul.mubr.bf16.gmra.mrb[0].mxu0 %v90
  %v202 = vpop.f32.mrb[0].mxu0
  %v203 = vadd.f32 0.0, %v202
  %v204 = vpop.f32.mrb[0].mxu0
  %v205 = vpop.f32.mrb[0].mxu0
  %v206 = vadd.f32 0.0, %v205
  %v207 = vpop.f32.mrb[0].mxu0
  %208 = vmatprep.mubr.bf16.mxu0 0
  %209 = vmatmul.mubr.bf16.gmra.mrb[0].mxu0 %v91
  %v210 = vpop.f32.mrb[0].mxu0
  %v211 = vadd.f32 0.0, %v210
  %v212 = vpop.f32.mrb[0].mxu0
  %v213 = vpop.f32.mrb[0].mxu0
  %v214 = vadd.f32 0.0, %v213
  %v215 = vpop.f32.mrb[0].mxu0
  %216 = vmatprep.mubr.bf16.mxu0 0
  %217 = vmatmul.mubr.bf16.gmra.mrb[0].mxu0 %v92
  %v218 = vpop.f32.mrb[0].mxu0
  %v219 = vadd.f32 0.0, %v218
  %v220 = vpop.f32.mrb[0].mxu0
  %v221 = vpop.f32.mrb[0].mxu0
  %v222 = vadd.f32 0.0, %v221
  %v223 = vpop.f32.mrb[0].mxu0
  %224 = vmatprep.mubr.bf16.mxu0 0
  %225 = vmatmul.mubr.bf16.gmra.mrb[0].mxu0 %v93
  %v226 = vpop.f32.mrb[0].mxu0
  %v227 = vadd.f32 0.0, %v226
  %v228 = vpop.f32.mrb[0].mxu0
  %v229 = vpop.f32.mrb[0].mxu0
  %v230 = vadd.f32 0.0, %v229
  %v231 = vpop.f32.mrb[0].mxu0
  %232 = vmatprep.mubr.bf16.mxu0 0
  %233 = vmatmul.mubr.bf16.gmra.mrb[0].mxu0 %v94
  %v234 = vpop.f32.mrb[0].mxu0
  %v235 = vadd.f32 0.0, %v234
  %v236 = vpop.f32.mrb[0].mxu0
  %v237 = vpop.f32.mrb[0].mxu0
  %v238 = vadd.f32 0.0, %v237
  %v239 = vpop.f32.mrb[0].mxu0
  %240 = vmatprep.mubr.bf16.mxu0 0
  %241 = vmatmul.mubr.bf16.gmra.mrb[0].mxu0 %v95
  %v242 = vpop.f32.mrb[0].mxu0
  %v243 = vadd.f32 0.0, %v242
  %v244 = vpop.f32.mrb[0].mxu0
  %v245 = vpop.f32.mrb[0].mxu0
  %v246 = vadd.f32 0.0, %v245
  %v247 = vpop.f32.mrb[0].mxu0
  %248 = vdwg.mxu0
  %v249 = vmax.f32 %v187, 0.0
  %v250 = vmax.f32 %v190, 0.0
  %v251 = vmax.f32 %v195, 0.0
  %v252 = vmax.f32 %v198, 0.0
  %v253 = vmax.f32 %v203, 0.0
  %v254 = vmax.f32 %v206, 0.0
  %v255 = vmax.f32 %v211, 0.0
  %v256 = vmax.f32 %v214, 0.0
  %v257 = vmax.f32 %v219, 0.0
  %v258 = vmax.f32 %v222, 0.0
  %v259 = vmax.f32 %v227, 0.0
  %v260 = vmax.f32 %v230, 0.0
  %v261 = vmax.f32 %v235, 0.0
  %v262 = vmax.f32 %v238, 0.0
  %v263 = vmax.f32 %v243, 0.0
  %v264 = vmax.f32 %v246, 0.0
  %vm265 = vcmask 261120
  %v266 = vsel %vm265, %v249, 0.0
  %v267 = vsel %vm265, %v250, 0.0
  %v268 = vadd.f32 %v266, %v267
  %v269 = vrot.slane %v268, 4
  %v270 = vadd.f32 %v268, %v269
  %v271 = vrot.slane %v270, 2
  %v272 = vadd.f32 %v270, %v271
  %v273 = vrot.slane %v272, 1
  %v274 = vadd.f32 %v272, %v273
  %v275 = vsel %vm265, %v251, 0.0
  %v276 = vsel %vm265, %v252, 0.0
  %v277 = vadd.f32 %v275, %v276
  %v278 = vrot.slane %v277, 4
  %v279 = vadd.f32 %v277, %v278
  %v280 = vrot.slane %v279, 2
  %v281 = vadd.f32 %v279, %v280
  %v282 = vrot.slane %v281, 1
  %v283 = vadd.f32 %v281, %v282
  %v284 = vsel %vm265, %v253, 0.0
  %v285 = vsel %vm265, %v254, 0.0
  %v286 = vadd.f32 %v284, %v285
  %v287 = vrot.slane %v286, 4
  %v288 = vadd.f32 %v286, %v287
  %v289 = vrot.slane %v288, 2
  %v290 = vadd.f32 %v288, %v289
  %v291 = vrot.slane %v290, 1
  %v292 = vadd.f32 %v290, %v291
  %v293 = vsel %vm265, %v255, 0.0
  %v294 = vsel %vm265, %v256, 0.0
  %v295 = vadd.f32 %v293, %v294
  %v296 = vrot.slane %v295, 4
  %v297 = vadd.f32 %v295, %v296
  %v298 = vrot.slane %v297, 2
  %v299 = vadd.f32 %v297, %v298
  %v300 = vrot.slane %v299, 1
  %v301 = vadd.f32 %v299, %v300
  %v302 = vsel %vm265, %v257, 0.0
  %v303 = vsel %vm265, %v258, 0.0
  %v304 = vadd.f32 %v302, %v303
  %v305 = vrot.slane %v304, 4
  %v306 = vadd.f32 %v304, %v305
  %v307 = vrot.slane %v306, 2
  %v308 = vadd.f32 %v306, %v307
  %v309 = vrot.slane %v308, 1
  %v310 = vadd.f32 %v308, %v309
  %v311 = vsel %vm265, %v259, 0.0
  %v312 = vsel %vm265, %v260, 0.0
  %v313 = vadd.f32 %v311, %v312
  %v314 = vrot.slane %v313, 4
  %v315 = vadd.f32 %v313, %v314
  %v316 = vrot.slane %v315, 2
  %v317 = vadd.f32 %v315, %v316
  %v318 = vrot.slane %v317, 1
  %v319 = vadd.f32 %v317, %v318
  %v320 = vsel %vm265, %v261, 0.0
  %v321 = vsel %vm265, %v262, 0.0
  %v322 = vadd.f32 %v320, %v321
  %v323 = vrot.slane %v322, 4
  %v324 = vadd.f32 %v322, %v323
  %v325 = vrot.slane %v324, 2
  %v326 = vadd.f32 %v324, %v325
  %v327 = vrot.slane %v326, 1
  %v328 = vadd.f32 %v326, %v327
  %v329 = vsel %vm265, %v263, 0.0
  %v330 = vsel %vm265, %v264, 0.0
  %v331 = vadd.f32 %v329, %v330
  %v332 = vrot.slane %v331, 4
  %v333 = vadd.f32 %v331, %v332
  %v334 = vrot.slane %v333, 2
  %v335 = vadd.f32 %v333, %v334
  %v336 = vrot.slane %v335, 1
  %v337 = vadd.f32 %v335, %v336
  %v338 = vpack.c.bf16 %v274, %v274
  %v339 = vpack.c.bf16 %v283, %v283
  %v340 = vpack.c.bf16 %v292, %v292
  %v341 = vpack.c.bf16 %v301, %v301
  %v342 = vpack.c.bf16 %v310, %v310
  %v343 = vpack.c.bf16 %v319, %v319
  %v344 = vpack.c.bf16 %v328, %v328
  %v345 = vpack.c.bf16 %v337, %v337
  %v346 = vld [vmem:[%s2] sm:$0xf]
  %v347 = vld [vmem:[%s2 + $0x4] sm:$0xf]
  %v348 = vld [vmem:[%s2 + $0x8] sm:$0xf]
  %v349 = vld [vmem:[%s2 + $0xc] sm:$0xf]
  %v350 = vld [vmem:[%s3] sm:$0x1]
  %v352 = vlaneseq
  %v353 = vshrl.u32 %v352, 7
  %v354 = vsub.s32 0, %v353
  %v355 = vrot.slane %v350, %v354
  %v365 = vunpack.c.l.b16 %v338
  %v366 = vunpack.c.l.b16 %v339
  %v367 = vunpack.c.l.b16 %v340
  %v368 = vunpack.c.l.b16 %v341
  %v369 = vunpack.c.l.b16 %v342
  %v370 = vunpack.c.l.b16 %v343
  %v371 = vunpack.c.l.b16 %v344
  %v372 = vunpack.c.l.b16 %v345
  %vm373 = vcmask 1041409
  %v374 = vsel %vm373, %v366, %v365
  %vm375 = vcmask 1042434
  %v376 = vsel %vm375, %v367, %v374
  %vm377 = vcmask 1043459
  %v378 = vsel %vm377, %v368, %v376
  %vm379 = vcmask 1044484
  %v380 = vsel %vm379, %v369, %v378
  %vm381 = vcmask 1045509
  %v382 = vsel %vm381, %v370, %v380
  %vm383 = vcmask 1046534
  %v384 = vsel %vm383, %v371, %v382
  %vm385 = vcmask 1047559
  %v386 = vsel %vm385, %v372, %v384
  %v387 = vpack.c.b16 %v386, %v386
  %v392 = vunpack.c.l.b16 %v346
  %v393 = vunpack.c.l.b16 %v347
  %v394 = vunpack.c.l.b16 %v348
  %v395 = vunpack.c.l.b16 %v349
  %v396 = vpack.c.b16 %v393, %v392
  %v397 = vpack.c.b16 %v395, %v394
  %v401 = vsel %vm265, %v387, 0
  %403 = vmatprep.subr.bf16.mxu0 0
  %404 = vmatpush1.bf16.msra.mxu0 %v396
  %405 = vmatprep.subr.bf16.mxu0 0
  %406 = vmatpush1.bf16.msra.mxu0 %v397
  %407 = vmatprep.subr.bf16.mxu0 0
  %408 = vmatpush1.bf16.msra.mxu0 0
  %409 = vmatprep.subr.bf16.mxu0 0
  %410 = vmatpush1.bf16.msra.mxu0 0
  %411 = vmatprep.subr.bf16.mxu0 0
  %412 = vmatpush1.bf16.msra.mxu0 0
  %413 = vmatprep.subr.bf16.mxu0 0
  %414 = vmatpush1.bf16.msra.mxu0 0
  %415 = vmatprep.subr.bf16.mxu0 0
  %416 = vmatpush1.bf16.msra.mxu0 0
  %417 = vmatprep.subr.bf16.mxu0 0
  %418 = vmatpush1.bf16.msra.mxu0 0
  %419 = vmatprep.subr.bf16.mxu0 0
  %420 = vmatpush1.bf16.msra.mxu0 0
  %421 = vmatprep.subr.bf16.mxu0 0
  %422 = vmatpush1.bf16.msra.mxu0 0
  %423 = vmatprep.subr.bf16.mxu0 0
  %424 = vmatpush1.bf16.msra.mxu0 0
  %425 = vmatprep.subr.bf16.mxu0 0
  %426 = vmatpush1.bf16.msra.mxu0 0
  %427 = vmatprep.subr.bf16.mxu0 0
  %428 = vmatpush1.bf16.msra.mxu0 0
  %429 = vmatprep.subr.bf16.mxu0 0
  %430 = vmatpush1.bf16.msra.mxu0 0
  %431 = vmatprep.subr.bf16.mxu0 0
  %432 = vmatpush1.bf16.msra.mxu0 0
  %433 = vmatprep.subr.bf16.mxu0 0
  %434 = vmatpush1.bf16.msra.mxu0 0
  %435 = vmatprep.mubr.bf16.mxu0 0
  %436 = vmatmul.mubr.bf16.gmra.mrb[0].mxu0 %v401
  %v437 = vpop.f32.mrb[0].mxu0
  %v438 = vadd.f32 %v355, %v437
  %v439 = vpop.f32.mrb[0].mxu0
  %v440 = vpop.f32.mrb[0].mxu0
  %v441 = vpop.f32.mrb[0].mxu0
  %442 = vdwg.mxu0
  %v443 = vmax.f32 %v438, 0.0
  %v444 = vpack.c.bf16 %v443, %v443
  %v445 = vld [vmem:[%s4] sm:$0xf]
  %v446 = vld [vmem:[%s4 + $0x4] sm:$0xf]
  %v447 = vld [vmem:[%s4 + $0x8] sm:$0xf]
  %v448 = vld [vmem:[%s4 + $0xc] sm:$0xf]
  %v449 = vld [vmem:[%s5] sm:$0x1]
  %v451 = vlaneseq
  %v452 = vshrl.u32 %v451, 7
  %v453 = vsub.s32 0, %v452
  %v454 = vrot.slane %v449, %v453
  %v460 = vunpack.c.l.b16 %v445
  %v461 = vunpack.c.l.b16 %v446
  %v462 = vunpack.c.l.b16 %v447
  %v463 = vunpack.c.l.b16 %v448
  %v464 = vpack.c.b16 %v461, %v460
  %v465 = vpack.c.b16 %v463, %v462
  %v469 = vsel %vm265, %v444, 0
  %471 = vmatprep.subr.bf16.mxu0 0
  %472 = vmatpush1.bf16.msra.mxu0 %v464
  %473 = vmatprep.subr.bf16.mxu0 0
  %474 = vmatpush1.bf16.msra.mxu0 %v465
  %475 = vmatprep.subr.bf16.mxu0 0
  %476 = vmatpush1.bf16.msra.mxu0 0
  %477 = vmatprep.subr.bf16.mxu0 0
  %478 = vmatpush1.bf16.msra.mxu0 0
  %479 = vmatprep.subr.bf16.mxu0 0
  %480 = vmatpush1.bf16.msra.mxu0 0
  %481 = vmatprep.subr.bf16.mxu0 0
  %482 = vmatpush1.bf16.msra.mxu0 0
  %483 = vmatprep.subr.bf16.mxu0 0
  %484 = vmatpush1.bf16.msra.mxu0 0
  %485 = vmatprep.subr.bf16.mxu0 0
  %486 = vmatpush1.bf16.msra.mxu0 0
  %487 = vmatprep.subr.bf16.mxu0 0
  %488 = vmatpush1.bf16.msra.mxu0 0
  %489 = vmatprep.subr.bf16.mxu0 0
  %490 = vmatpush1.bf16.msra.mxu0 0
  %491 = vmatprep.subr.bf16.mxu0 0
  %492 = vmatpush1.bf16.msra.mxu0 0
  %493 = vmatprep.subr.bf16.mxu0 0
  %494 = vmatpush1.bf16.msra.mxu0 0
  %495 = vmatprep.subr.bf16.mxu0 0
  %496 = vmatpush1.bf16.msra.mxu0 0
  %497 = vmatprep.subr.bf16.mxu0 0
  %498 = vmatpush1.bf16.msra.mxu0 0
  %499 = vmatprep.subr.bf16.mxu0 0
  %500 = vmatpush1.bf16.msra.mxu0 0
  %501 = vmatprep.subr.bf16.mxu0 0
  %502 = vmatpush1.bf16.msra.mxu0 0
  %503 = vmatprep.mubr.bf16.mxu0 0
  %504 = vmatmul.mubr.bf16.gmra.mrb[0].mxu0 %v469
  %v505 = vpop.f32.mrb[0].mxu0
  %v506 = vadd.f32 %v454, %v505
  %v507 = vpop.f32.mrb[0].mxu0
  %v508 = vpop.f32.mrb[0].mxu0
  %v509 = vpop.f32.mrb[0].mxu0
  %510 = vdwg.mxu0
  %511 = vst [vmem:[%s6] sm:$0xff] %v506
  // Predicated region
  $region26: #{protmimo_forward.1} parent=0 // pred_check
    _
  $region27: #{protmimo_forward.1} parent=0 // pred_check_branch
    %513 = sbr.rel (0) target = $region29
  $region28: #{protmimo_forward.1} parent=0 // pred_region
    _
  $region29: #{protmimo_forward.1} parent=0 // pred_fallthru
    _
  // Predicated region
  $region30: #{protmimo_forward.1} parent=0 // pred_check
    _
  $region31: #{protmimo_forward.1} parent=0 // pred_check_branch
    %515 = sbr.rel (0) target = $region33
  $region32: #{protmimo_forward.1} parent=0 // pred_region
    _
  $region33: #{protmimo_forward.1} parent=0 // pred_fallthru
    _

</llo_original>
